<compile_context>
chip_gen: v6e
topology: v6e:2x2x1
jax: 0.10.0
libtpu: 0.0.40
codegen_flags: <defaults>
</compile_context>

<pallas_src>
import jax
import jax.numpy as jnp
from jax.experimental import pallas as pl
from jax.experimental.pallas import tpu as pltpu


def _round_up(v, m):
    return (v + m - 1) // m * m


# --------------------------------------------------------------------------
# Kernel: one (batch b, node row-block i) tile per grid step.
# --------------------------------------------------------------------------
def stgcn_kernel(ahat_ref, feat_all_ref, feat_row_ref, wpack_ref, bpack_ref, out_ref):
    """
    ahat_ref     : (RB, N)        bf16  adjacency rows of this block (shared over batch)
    feat_all_ref : (N, FT)        bf16  [x | temporal | 0] for ALL nodes of batch b
    feat_row_ref : (RB, FT)       bf16  same, restricted to this row block
    wpack_ref    : (2*FT + H, H)  bf16  rows 0:FT      -> Wg  (zero rows for t/pad cols)
                                        rows FT:FT+H   -> W1h
                                        rows FT+H:     -> W1t (zero rows for x/pad cols)
    bpack_ref    : (8, 128)       f32   row0=bg, row1=b1, row2=w2z, row3=w2x, row4[0]=b2
    out_ref      : (RB, 128)      f32   result broadcast across lanes (lane-dense store)
    """
    ft = feat_all_ref.shape[1]
    hd = wpack_ref.shape[1]

    ahat = ahat_ref[...]                       # (RB, N)  bf16
    feat_all = feat_all_ref[...]               # (N, FT)  bf16
    feat_row = feat_row_ref[...]               # (RB, FT) bf16

    wg = wpack_ref[0:ft, :]                    # (FT, H) bf16
    w1h = wpack_ref[ft:ft + hd, :]             # (H, H)  bf16
    w1t = wpack_ref[ft + hd:2 * ft + hd, :]    # (FT, H) bf16
    bg = bpack_ref[0:1, 0:hd]                  # (1, H)  f32
    b1 = bpack_ref[1:2, 0:hd]                  # (1, H)  f32
    w2z = bpack_ref[2:3, 0:hd]                 # (1, H)  f32
    w2x = bpack_ref[3:4, 0:ft]                 # (1, FT) f32
    b2 = bpack_ref[4:5, 0:1]                   # (1, 1)  f32

    # GCNConv, reordered: (A_hat_block @ feat_all) @ Wg_pad + bg, ReLU.
    # Zero rows of Wg_pad kill the temporal/pad columns, so this equals
    # A_hat @ (x @ Wg) up to rounding.  bf16 MXU dots, f32 accumulation.
    m = jnp.dot(ahat, feat_all, preferred_element_type=jnp.float32)        # (RB, FT)
    h = jnp.dot(m.astype(jnp.bfloat16), wg,
                preferred_element_type=jnp.float32) + bg                   # (RB, H)
    h = jnp.maximum(h, 0.0)

    # fc1(concat(h, temporal)) as two dots (no lane-axis concat): zero rows of
    # W1t_pad kill the x/pad columns of feat_row.
    z1 = (jnp.dot(h.astype(jnp.bfloat16), w1h, preferred_element_type=jnp.float32)
          + jnp.dot(feat_row, w1t, preferred_element_type=jnp.float32) + b1)
    z1 = jnp.maximum(z1, 0.0)                                              # (RB, H)

    # fc2(concat(z1, x)): 1-wide output -> VPU multiply + lane reduction
    # (avoids a 1-column MXU matmul; zeros in w2x_pad kill temporal/pad cols).
    o = (jnp.sum(z1 * w2z, axis=-1, keepdims=True)
         + jnp.sum(feat_row.astype(jnp.float32) * w2x, axis=-1, keepdims=True)
         + b2)                                                             # (RB, 1)
    o = jnp.maximum(o, 0.0)

    # Lane-dense writeback: unmasked full-width store; wrapper slices [..., :1].
    out_ref[...] = jnp.broadcast_to(o, out_ref.shape)


# --------------------------------------------------------------------------
# Host-side packing + wrapper
# --------------------------------------------------------------------------
def pack_inputs(x, temporal, params):
    """x: (B, N, F), temporal: (B, N, Tf) -> packed features / weights / biases."""
    B, N, F = x.shape
    Tf = temporal.shape[-1]
    H = params["wg"].shape[1]
    FT = _round_up(F + Tf, 8)            # padded feature width (lane-packed x|t)

    assert H <= 128 and FT <= 128, "bias/fc2 packing assumes H <= 128 and F+Tf <= 128"

    feat = jnp.zeros((B, N, FT), jnp.float32)
    feat = feat.at[:, :, 0:F].set(x).at[:, :, F:F + Tf].set(temporal)

    # Weight stack: Wg (padded rows), W1h, W1t (padded rows) -> one DMA.
    wpack = jnp.zeros((2 * FT + H, H), jnp.float32)
    wpack = wpack.at[0:F, :].set(params["wg"])                        # GCN weight (x rows)
    wpack = wpack.at[FT:FT + H, :].set(params["w1h"])                 # fc1: h part
    wpack = wpack.at[FT + H + F:FT + H + F + Tf, :].set(params["w1t"])  # fc1: t part

    # Biases + fc2 vectors packed into one (8, 128) f32 tile.
    bpack = jnp.zeros((8, 128), jnp.float32)
    bpack = bpack.at[0, 0:H].set(params["bg"][0])
    bpack = bpack.at[1, 0:H].set(params["b1"][0])
    bpack = bpack.at[2, 0:H].set(params["w2z"][:, 0])                 # fc2: z1 part
    bpack = bpack.at[3, 0:F].set(params["w2x"][:, 0])                 # fc2: x part
    bpack = bpack.at[4, 0].set(params["b2"][0, 0])
    return feat, wpack, bpack, FT


def improved_stgcn_forward(ahat, x, temporal, params, *, row_block=None):
    """Batched forward.  ahat: (N, N) shared; x: (B, N, F); temporal: (B, N, Tf)."""
    B, N, _ = x.shape
    H = params["wg"].shape[1]
    feat, wpack, bpack, FT = pack_inputs(x, temporal, params)

    # bf16 at the pallas_call boundary (halves DMA bytes, MXU-native on v6e/v7x);
    # biases / fc2 vectors stay f32 (added / reduced in f32 inside the kernel).
    ahat_bf = ahat.astype(jnp.bfloat16)
    feat_bf = feat.astype(jnp.bfloat16)
    wpack_bf = wpack.astype(jnp.bfloat16)

    if row_block is None:
        # Largest row block that keeps the double-buffered A_hat stream well
        # inside every generation's scoped-VMEM budget (v5e 16 MiB default).
        row_block = min(N, 512)
        while row_block > 16 and 2 * (2 * row_block * N) > (16 << 20):
            row_block //= 2
        while N % row_block != 0 and row_block > 1:
            row_block //= 2
    assert N % row_block == 0, "N must be divisible by row_block"
    assert row_block == N or row_block % 16 == 0, \
        "row_block must be a multiple of 16 (bf16 sublane packing) or equal N"

    grid = (B, N // row_block)

    # Explicit VMEM budget: double-buffered blocks + resident packed weights +
    # f32 temporaries, with 2x headroom, capped below v7x's 64 MiB physical VMEM.
    budget = (2 * (2 * row_block * N)                # ahat block (bf16, 2 buffers)
              + 2 * (2 * N * FT)                     # feat_all (bf16)
              + 2 * (2 * row_block * FT)             # feat_row (bf16)
              + 2 * (2 * FT + H) * H                 # wpack (bf16)
              + 4 * 8 * 128                          # bpack (f32)
              + 2 * (4 * row_block * 128)            # out block (f32)
              + 4 * row_block * (FT + 2 * H + 128))  # f32 temporaries
    vmem_limit = int(min(60 << 20, max(32 << 20, 2 * budget)))

    flops = (2 * B * N * (N * FT + FT * H + H * H + FT * H)
             + 4 * B * N * (H + FT))
    bytes_accessed = (B * N * N * 2            # ahat streamed once per batch instance
                      + feat_bf.size * 2 * 2   # feat fetched through two BlockSpecs
                      + wpack_bf.size * 2
                      + bpack.size * 4
                      + B * N * 128 * 4)       # lane-dense output slab

    out = pl.pallas_call(
        stgcn_kernel,
        out_shape=jax.ShapeDtypeStruct((B, N, 128), jnp.float32),
        grid=grid,
        in_specs=[
            pl.BlockSpec((row_block, N), lambda b, i: (i, 0)),            # ahat row block
            pl.BlockSpec((None, N, FT), lambda b, i: (b, 0, 0)),          # features, all nodes
            pl.BlockSpec((None, row_block, FT), lambda b, i: (b, i, 0)),  # features, this block
            pl.BlockSpec((2 * FT + H, H), lambda b, i: (0, 0)),           # packed weights
            pl.BlockSpec((8, 128), lambda b, i: (0, 0)),                  # packed biases / fc2
        ],
        out_specs=pl.BlockSpec((None, row_block, 128), lambda b, i: (b, i, 0)),
        compiler_params=pltpu.CompilerParams(
            dimension_semantics=("parallel", "parallel"),
            vmem_limit_bytes=vmem_limit),
        cost_estimate=pl.CostEstimate(flops=int(flops), transcendentals=0,
                                      bytes_accessed=int(bytes_accessed)),
    )(ahat_bf, feat_bf, feat_bf, wpack_bf, bpack)
    return out[:, :, :1]


# --------------------------------------------------------------------------
# Plain-JAX glue + references
# --------------------------------------------------------------------------
def build_normalized_adjacency(edge_index, num_nodes):
    """Dense GCN normalization D^{-1/2}(A+I)D^{-1/2} (sparse scatter done host-side)."""
    src, dst = edge_index
    adj = jnp.zeros((num_nodes, num_nodes), jnp.float32).at[dst, src].add(1.0)
    adj = adj + jnp.eye(num_nodes, dtype=jnp.float32)
    deg = adj.sum(axis=1)
    dinv = jnp.where(deg > 0, jax.lax.rsqrt(deg), 0.0)
    return dinv[:, None] * adj * dinv[None, :]


def make_params(key, node_features, hidden_dim, temporal_features_dim):
    ks = jax.random.split(key, 7)
    s = 0.1
    return {
        "wg":  s * jax.random.normal(ks[0], (node_features, hidden_dim), jnp.float32),
        "bg":  s * jax.random.normal(ks[1], (1, hidden_dim), jnp.float32),
        "w1h": s * jax.random.normal(ks[2], (hidden_dim, hidden_dim), jnp.float32),
        "w1t": s * jax.random.normal(ks[3], (temporal_features_dim, hidden_dim), jnp.float32),
        "b1":  s * jax.random.normal(ks[4], (1, hidden_dim), jnp.float32),
        "w2z": s * jax.random.normal(ks[5], (hidden_dim, 1), jnp.float32),
        "w2x": s * jax.random.normal(ks[6], (node_features, 1), jnp.float32),
        "b2":  jnp.array([[0.05]], jnp.float32),
    }


def reference_forward_f32(ahat, x, temporal, p):
    """Original module semantics in pure f32 (batched)."""
    h = jnp.maximum(jnp.einsum("ij,bjh->bih", ahat, x @ p["wg"]) + p["bg"], 0.0)
    z1 = jnp.maximum(h @ p["w1h"] + temporal @ p["w1t"] + p["b1"], 0.0)
    return jnp.maximum(z1 @ p["w2z"] + x @ p["w2x"] + p["b2"], 0.0)


def reference_forward_bf16_matched(ahat, x, temporal, p):
    """Pure-JAX mirror of the kernel's math including its bf16 rounding points
    and the (A@X)@Wg matmul order."""
    q = lambda a: a.astype(jnp.bfloat16).astype(jnp.float32)
    ahat_q, x_q, t_q = q(ahat), q(x), q(temporal)
    ax = jnp.einsum("ij,bjf->bif", ahat_q, x_q)                 # f32 acc of bf16 dot
    h = jnp.maximum(q(ax) @ q(p["wg"]) + p["bg"], 0.0)
    z1 = jnp.maximum(q(h) @ q(p["w1h"]) + t_q @ q(p["w1t"]) + p["b1"], 0.0)
    out = (jnp.sum(z1 * p["w2z"][:, 0], axis=-1, keepdims=True)
           + jnp.sum(x_q * p["w2x"][:, 0], axis=-1, keepdims=True) + p["b2"])
    return jnp.maximum(out, 0.0)


# --------------------------------------------------------------------------
if __name__ == "__main__":
    B = 8                      # batch of graphs / timesteps in one pallas_call
    N = 16                     # nodes
    node_features = 4
    hidden_dim = 32
    temporal_features_dim = 10

    key = jax.random.PRNGKey(0)
    k_x, k_t, k_p = jax.random.split(key, 3)

    x = jax.random.normal(k_x, (B, N, node_features), jnp.float32)
    temporal = jax.random.normal(k_t, (B, N, temporal_features_dim), jnp.float32)

    # deterministic bidirectional ring graph (shared across the batch)
    idx = jnp.arange(N)
    src = jnp.concatenate([idx, (idx + 1) % N])
    dst = jnp.concatenate([(idx + 1) % N, idx])
    edge_index = jnp.stack([src, dst])

    ahat = build_normalized_adjacency(edge_index, N)
    params = make_params(k_p, node_features, hidden_dim, temporal_features_dim)

    out = improved_stgcn_forward(ahat, x, temporal, params)
    jax.block_until_ready(out)
    assert out.shape == (B, N, 1)

    # tight check against a bit-matched (bf16-rounded, reordered) reference,
    # loose check against the exact-f32 module semantics.
    ref_matched = reference_forward_bf16_matched(ahat, x, temporal, params)
    ref_f32 = reference_forward_f32(ahat, x, temporal, params)
    assert jnp.allclose(out, ref_matched, atol=5e-3, rtol=5e-3), \
        float(jnp.max(jnp.abs(out - ref_matched)))
    assert jnp.allclose(out, ref_f32, atol=5e-2, rtol=5e-2), \
        float(jnp.max(jnp.abs(out - ref_f32)))
    print("KERNEL_OK")
</pallas_src>

<mosaic_0001>
module attributes {stable_mosaic.version = 11 : i64} {
  func.func @stgcn_kernel(%arg0: i32, %arg1: i32, %arg2: memref<16x16xbf16, #tpu.memory_space<vmem>>, %arg3: memref<1x16x16xbf16, #tpu.memory_space<vmem>>, %arg4: memref<1x16x16xbf16, #tpu.memory_space<vmem>>, %arg5: memref<64x32xbf16, #tpu.memory_space<vmem>>, %arg6: memref<8x128xf32, #tpu.memory_space<vmem>>, %arg7: memref<1x16x128xf32, #tpu.memory_space<vmem>>) attributes {dimension_semantics = [#tpu.dimension_semantics<parallel>, #tpu.dimension_semantics<parallel>], iteration_bounds = array<i64: 8, 1>, scalar_prefetch = 0 : i64, scratch_operands = 0 : i64, tpu.core_type = #tpu.core_type<tc>, window_params = [{transform_indices = @transform_0, window_bounds = array<i64: 16, 16>}, {transform_indices = @transform_1, window_bounds = array<i64: 1, 16, 16>}, {transform_indices = @transform_2, window_bounds = array<i64: 1, 16, 16>}, {pipeline_mode = #tpu.pipeline_mode<synchronous>, transform_indices = @transform_3, window_bounds = array<i64: 64, 32>}, {pipeline_mode = #tpu.pipeline_mode<synchronous>, transform_indices = @transform_4, window_bounds = array<i64: 8, 128>}, {transform_indices = @transform_5, window_bounds = array<i64: 1, 16, 128>}]} {
    %c0 = arith.constant 0 : index
    %c0_0 = arith.constant 0 : index
    %0 = vector.load %arg2[%c0, %c0_0] : memref<16x16xbf16, #tpu.memory_space<vmem>>, vector<16x16xbf16>
    %c0_1 = arith.constant 0 : index
    %c0_2 = arith.constant 0 : index
    %c0_3 = arith.constant 0 : index
    %1 = vector.load %arg3[%c0_1, %c0_2, %c0_3] : memref<1x16x16xbf16, #tpu.memory_space<vmem>>, vector<1x16x16xbf16>
    %2 = vector.shape_cast %1 : vector<1x16x16xbf16> to vector<16x16xbf16>
    %c0_4 = arith.constant 0 : index
    %c0_5 = arith.constant 0 : index
    %c0_6 = arith.constant 0 : index
    %3 = vector.load %arg4[%c0_4, %c0_5, %c0_6] : memref<1x16x16xbf16, #tpu.memory_space<vmem>>, vector<1x16x16xbf16>
    %4 = vector.shape_cast %3 : vector<1x16x16xbf16> to vector<16x16xbf16>
    %c0_7 = arith.constant 0 : index
    %c0_8 = arith.constant 0 : index
    %5 = vector.load %arg5[%c0_7, %c0_8] : memref<64x32xbf16, #tpu.memory_space<vmem>>, vector<16x32xbf16>
    %c16 = arith.constant 16 : index
    %c0_9 = arith.constant 0 : index
    %6 = vector.load %arg5[%c16, %c0_9] : memref<64x32xbf16, #tpu.memory_space<vmem>>, vector<32x32xbf16>
    %c48 = arith.constant 48 : index
    %c0_10 = arith.constant 0 : index
    %7 = vector.load %arg5[%c48, %c0_10] : memref<64x32xbf16, #tpu.memory_space<vmem>>, vector<16x32xbf16>
    %c0_11 = arith.constant 0 : index
    %c0_12 = arith.constant 0 : index
    %8 = vector.load %arg6[%c0_11, %c0_12] : memref<8x128xf32, #tpu.memory_space<vmem>>, vector<1x32xf32>
    %c1 = arith.constant 1 : index
    %c0_13 = arith.constant 0 : index
    %9 = vector.load %arg6[%c1, %c0_13] : memref<8x128xf32, #tpu.memory_space<vmem>>, vector<1x32xf32>
    %c2 = arith.constant 2 : index
    %c0_14 = arith.constant 0 : index
    %10 = vector.load %arg6[%c2, %c0_14] : memref<8x128xf32, #tpu.memory_space<vmem>>, vector<1x32xf32>
    %c3 = arith.constant 3 : index
    %c0_15 = arith.constant 0 : index
    %11 = vector.load %arg6[%c3, %c0_15] : memref<8x128xf32, #tpu.memory_space<vmem>>, vector<1x16xf32>
    %c4 = arith.constant 4 : index
    %c0_16 = arith.constant 0 : index
    %12 = vector.load %arg6[%c4, %c0_16] : memref<8x128xf32, #tpu.memory_space<vmem>>, vector<1x1xf32>
    %cst = arith.constant dense<0.000000e+00> : vector<16x16xf32>
    %13 = tpu.matmul %0, %2, %cst {dimension_numbers = #tpu.dot_dimension_numbers<[1], [0], [0], [1], [0, 0, 1, 1], [], []>} : vector<16x16xbf16>, vector<16x16xbf16>, vector<16x16xf32> -> vector<16x16xf32>
    %14 = arith.truncf %13 : vector<16x16xf32> to vector<16x16xbf16>
    %cst_17 = arith.constant dense<0.000000e+00> : vector<16x32xf32>
    %15 = tpu.matmul %14, %5, %cst_17 {dimension_numbers = #tpu.dot_dimension_numbers<[1], [0], [0], [1], [0, 0, 1, 1], [], []>} : vector<16x16xbf16>, vector<16x32xbf16>, vector<16x32xf32> -> vector<16x32xf32>
    %16 = vector.broadcast %8 : vector<1x32xf32> to vector<16x32xf32>
    %17 = arith.addf %15, %16 : vector<16x32xf32>
    %cst_18 = arith.constant 0.000000e+00 : f32
    %18 = vector.broadcast %cst_18 : f32 to vector<16x32xf32>
    %19 = arith.maximumf %17, %18 : vector<16x32xf32>
    %20 = arith.truncf %19 : vector<16x32xf32> to vector<16x32xbf16>
    %cst_19 = arith.constant dense<0.000000e+00> : vector<16x32xf32>
    %21 = tpu.matmul %20, %6, %cst_19 {dimension_numbers = #tpu.dot_dimension_numbers<[1], [0], [0], [1], [0, 0, 1, 1], [], []>} : vector<16x32xbf16>, vector<32x32xbf16>, vector<16x32xf32> -> vector<16x32xf32>
    %cst_20 = arith.constant dense<0.000000e+00> : vector<16x32xf32>
    %22 = tpu.matmul %4, %7, %cst_20 {dimension_numbers = #tpu.dot_dimension_numbers<[1], [0], [0], [1], [0, 0, 1, 1], [], []>} : vector<16x16xbf16>, vector<16x32xbf16>, vector<16x32xf32> -> vector<16x32xf32>
    %23 = arith.addf %21, %22 : vector<16x32xf32>
    %24 = vector.broadcast %9 : vector<1x32xf32> to vector<16x32xf32>
    %25 = arith.addf %23, %24 : vector<16x32xf32>
    %cst_21 = arith.constant 0.000000e+00 : f32
    %26 = vector.broadcast %cst_21 : f32 to vector<16x32xf32>
    %27 = arith.maximumf %25, %26 : vector<16x32xf32>
    %28 = vector.broadcast %10 : vector<1x32xf32> to vector<16x32xf32>
    %29 = arith.mulf %27, %28 : vector<16x32xf32>
    %cst_22 = arith.constant dense<0.000000e+00> : vector<16xf32>
    %30 = vector.multi_reduction <add>, %29, %cst_22 [1] : vector<16x32xf32> to vector<16xf32>
    %31 = vector.shape_cast %30 : vector<16xf32> to vector<16x1xf32>
    %32 = arith.extf %4 : vector<16x16xbf16> to vector<16x16xf32>
    %33 = vector.broadcast %11 : vector<1x16xf32> to vector<16x16xf32>
    %34 = arith.mulf %32, %33 : vector<16x16xf32>
    %cst_23 = arith.constant dense<0.000000e+00> : vector<16xf32>
    %35 = vector.multi_reduction <add>, %34, %cst_23 [1] : vector<16x16xf32> to vector<16xf32>
    %36 = vector.shape_cast %35 : vector<16xf32> to vector<16x1xf32>
    %37 = arith.addf %31, %36 : vector<16x1xf32>
    %38 = vector.broadcast %12 : vector<1x1xf32> to vector<16x1xf32>
    %39 = arith.addf %37, %38 : vector<16x1xf32>
    %cst_24 = arith.constant 0.000000e+00 : f32
    %40 = vector.broadcast %cst_24 : f32 to vector<16x1xf32>
    %41 = arith.maximumf %39, %40 : vector<16x1xf32>
    %42 = vector.shape_cast %41 : vector<16x1xf32> to vector<16x1xf32>
    %43 = vector.broadcast %42 : vector<16x1xf32> to vector<16x128xf32>
    %c0_25 = arith.constant 0 : index
    %c0_26 = arith.constant 0 : index
    %c0_27 = arith.constant 0 : index
    %44 = vector.load %arg7[%c0_25, %c0_26, %c0_27] : memref<1x16x128xf32, #tpu.memory_space<vmem>>, vector<1x16x128xf32>
    %45 = vector.shape_cast %44 : vector<1x16x128xf32> to vector<16x128xf32>
    %46 = vector.shape_cast %43 : vector<16x128xf32> to vector<1x16x128xf32>
    tpu.vector_store %arg7[%c0_25, %c0_26, %c0_27], %46 {strides = array<i32>} : memref<1x16x128xf32, #tpu.memory_space<vmem>>, vector<1x16x128xf32>,
    return
  }
  func.func @transform_0(%arg0: i32, %arg1: i32) -> (i32, i32) {
    %c0_i32 = arith.constant 0 : i32
    %c0_i32_0 = arith.constant 0 : i32
    return %arg1, %c0_i32 : i32, i32
  }
  func.func @transform_1(%arg0: i32, %arg1: i32) -> (i32, i32, i32) {
    %c0_i32 = arith.constant 0 : i32
    %c0_i32_0 = arith.constant 0 : i32
    %c0_i32_1 = arith.constant 0 : i32
    return %arg0, %c0_i32, %c0_i32_0 : i32, i32, i32
  }
  func.func @transform_2(%arg0: i32, %arg1: i32) -> (i32, i32, i32) {
    %c0_i32 = arith.constant 0 : i32
    %c0_i32_0 = arith.constant 0 : i32
    return %arg0, %arg1, %c0_i32 : i32, i32, i32
  }
  func.func @transform_3(%arg0: i32, %arg1: i32) -> (i32, i32) {
    %c0_i32 = arith.constant 0 : i32
    %c0_i32_0 = arith.constant 0 : i32
    %c0_i32_1 = arith.constant 0 : i32
    return %c0_i32, %c0_i32_0 : i32, i32
  }
  func.func @transform_4(%arg0: i32, %arg1: i32) -> (i32, i32) {
    %c0_i32 = arith.constant 0 : i32
    %c0_i32_0 = arith.constant 0 : i32
    %c0_i32_1 = arith.constant 0 : i32
    return %c0_i32, %c0_i32_0 : i32, i32
  }
  func.func @transform_5(%arg0: i32, %arg1: i32) -> (i32, i32, i32) {
    %c0_i32 = arith.constant 0 : i32
    %c0_i32_0 = arith.constant 0 : i32
    return %arg0, %arg1, %c0_i32 : i32, i32, i32
  }
}

</mosaic_0001>

<llo_original>
// kernel: tpu_custom_call.1
$region0: #{tpu_custom_call.1}
  #allocation0 [shape = 'u32[]', space=smem, size = 0x4, offset = 0x4, fixed_abs, tag = 'smem constant byte address 0x4 - core index']
  #allocation1 [shape = 'u32[144,128]{1,0:T(1,128)}', space=vmem, size = 0x12000, scoped, tag = 'internal scratch']
  %s0 = inlined_call_operand.vmem [shape: bf16[16,16], index: 0, kind: input, shape index: {}]
  %s1 = inlined_call_operand.hbm [shape: bf16[8,16,16], index: 1, kind: input, shape index: {}]
  %s2 = inlined_call_operand.hbm [shape: bf16[8,16,16], index: 2, kind: input, shape index: {}]
  %s3 = inlined_call_operand.vmem [shape: bf16[64,32], index: 3, kind: input, shape index: {}]
  %s4 = inlined_call_operand.vmem [shape: f32[8,128], index: 4, kind: input, shape index: {}]
  %s5 = inlined_call_operand.hbm [shape: f32[8,16,128], index: 5, kind: output, shape index: {}]
  %s6 = sld [smem:[#allocation0]]
  $region61: #{tpu_custom_call.1} parent=0
    _
  %s8 = ssub.s32 1, %s6
  %s9 = scalar_select 0, %s8, %s6
  $region1: #{tpu_custom_call.1} parent=0
    #allocation2 [shape = 'u8[8192]{0}', space=vmem, size = 0x2000, scoped, tag = 'input window, operand 1']
    #allocation3 [shape = 's32[2]{0}', space=sflag, size = 0x8, scoped, tag = 'scoped memory for tpu_custom_call.1']
    #allocation4 [shape = 's32[2]{0}', space=sflag, size = 0x8, scoped, tag = 'scoped memory for tpu_custom_call.1']
    #allocation5 [shape = 'u8[8192]{0}', space=vmem, size = 0x2000, scoped, tag = 'input window, operand 2']
    #allocation6 [shape = 's32[2]{0}', space=sflag, size = 0x8, scoped, tag = 'scoped memory for tpu_custom_call.1']
    #allocation7 [shape = 'u8[16384]{0}', space=vmem, size = 0x4000, scoped, tag = 'output window, operand 0']
    %10 = vsyncpa [#allocation3], 0
    %s11 = scalar_lea.sflag [#allocation3], 1
    %12 = vsyncpa %s11, 0
    %13 = vsyncpa [#allocation6], 0
    %s14 = scalar_lea.sflag [#allocation6], 1
    %15 = vsyncpa %s14, 0
    %16 = vsyncpa [#allocation4], 0
    %s17 = scalar_lea.sflag [#allocation4], 1
    %18 = vsyncpa %s17, 0
    loop: start=0, step=1, limit=10
    $region2: #{tpu_custom_call.1} parent=1 // loop_pre_header
      _
    $region3: #{tpu_custom_call.1} parent=1 // loop_header
      %s20 = sphi 0, %s24
      %p21 = scmp.ge.s32.totalorder %s20, 10
      %s27 = sphi 0, %s39
      %s28 = sphi 0, %s35
      %s29 = sphi 0, %s27
      %s30 = sphi 0, %s28
      %s31 = sphi 0, %s29
      %s32 = sphi 0, %s30
      %s42 = sphi 0, %s44
      %s45 = sphi 0, %s42
      %s46 = sphi 0, %s45
      %s62 = sphi 0, %s46
      %s68 = sphi 0, %s70
      %s71 = sphi 0, %s68
      %s72 = sphi 0, %s71
      %s88 = sphi 0, %s72
      %s96 = sphi 0, %s98
      %s99 = sphi 0, %s96
      %s100 = sphi 0, %s99
      %s116 = sphi 0, %s100
      %s120 = sphi 0, %s120
      %s122 = sphi 0, %s120
      %s123 = sphi 0, %s122
      %s137 = sphi 0, %s123
      %s141 = sphi 0, %s141
      %s143 = sphi 0, %s141
      %s144 = sphi 0, %s143
      %s158 = sphi 0, %s144
      %s166 = sphi 0, %s168
      %s169 = sphi 0, %s166
      %s170 = sphi 0, %s169
      %s186 = sphi 0, %s170
    $region4: #{tpu_custom_call.1} parent=1 // loop_header_branch
      %23 = sbr.rel (%p21) target = $region8
    $region5: #{tpu_custom_call.1} parent=1 // loop_body
      %s25 = ssub.s32 %s20, 1
      %s26 = ssub.s32 %s20, 2
      %s33 = sadd.s32 1, %s28
      %p34 = scmp.ge.s32.totalorder %s33, 1
      %s35 = scalar_select %p34, 0, %s33
      %s36 = sadd.s32 1, %s27
      %s37 = scalar_select %p34, %s36, %s27
      %p38 = scmp.ge.s32.totalorder %s37, 8
      %s39 = scalar_select %p38, 0, %s37
      %s40 = ssub.s32 %s28, %s35
      %p41 = scmp.eq.s32.totalorder %s40, 0
      %s43 = sadd.s32 %s42, 1
      %s44 = scalar_select %p41, %s42, %s43
      %p47 = pneg %p41
      %p48 = scmp.eq.s32.totalorder %s20, 7
      %p49 = por %p47, %p48
      %p50 = scmp.ne.s32.totalorder %s42, %s45
      %p51 = scmp.eq.s32.totalorder %s20, 0
      %p52 = por %p50, %p51
      %p53 = scmp.ne.s32.totalorder %s42, %s45
      %p54 = scmp.eq.s32.totalorder %s25, 7
      %p55 = por %p53, %p54
      %p56 = scmp.ne.s32.totalorder %s45, %s46
      %p57 = scmp.eq.s32.totalorder %s25, 0
      %p58 = por %p56, %p57
      %p59 = scmp.ne.s32.totalorder %s45, %s46
      %p60 = scmp.eq.s32.totalorder %s26, 7
      %p61 = por %p59, %p60
      %p63 = scmp.ne.s32.totalorder %s46, %s62
      %p64 = scmp.eq.s32.totalorder %s26, 0
      %p65 = por %p63, %p64
      %s66 = ssub.s32 %s27, %s39
      %p67 = scmp.eq.s32.totalorder %s66, 0
      %s69 = sadd.s32 %s68, 1
      %s70 = scalar_select %p67, %s68, %s69
      %p73 = pneg %p67
      %p74 = scmp.eq.s32.totalorder %s20, 7
      %p75 = por %p73, %p74
      %p76 = scmp.ne.s32.totalorder %s68, %s71
      %p77 = scmp.eq.s32.totalorder %s20, 0
      %p78 = por %p76, %p77
      %p79 = scmp.ne.s32.totalorder %s68, %s71
      %p80 = scmp.eq.s32.totalorder %s25, 7
      %p81 = por %p79, %p80
      %p82 = scmp.ne.s32.totalorder %s71, %s72
      %p83 = scmp.eq.s32.totalorder %s25, 0
      %p84 = por %p82, %p83
      %p85 = scmp.ne.s32.totalorder %s71, %s72
      %p86 = scmp.eq.s32.totalorder %s26, 7
      %p87 = por %p85, %p86
      %p89 = scmp.ne.s32.totalorder %s72, %s88
      %p90 = scmp.eq.s32.totalorder %s26, 0
      %p91 = por %p89, %p90
      %s92 = ssub.s32 %s27, %s39
      %s93 = ssub.s32 %s28, %s35
      %s94 = sor.u32 %s92, %s93
      %p95 = scmp.eq.s32.totalorder %s94, 0
      %s97 = sadd.s32 %s96, 1
      %s98 = scalar_select %p95, %s96, %s97
      %p101 = pneg %p95
      %p102 = scmp.eq.s32.totalorder %s20, 7
      %p103 = por %p101, %p102
      %p104 = scmp.ne.s32.totalorder %s96, %s99
      %p105 = scmp.eq.s32.totalorder %s20, 0
      %p106 = por %p104, %p105
      %p107 = scmp.ne.s32.totalorder %s96, %s99
      %p108 = scmp.eq.s32.totalorder %s25, 7
      %p109 = por %p107, %p108
      %p110 = scmp.ne.s32.totalorder %s99, %s100
      %p111 = scmp.eq.s32.totalorder %s25, 0
      %p112 = por %p110, %p111
      %p113 = scmp.ne.s32.totalorder %s99, %s100
      %p114 = scmp.eq.s32.totalorder %s26, 7
      %p115 = por %p113, %p114
      %p117 = scmp.ne.s32.totalorder %s100, %s116
      %p118 = scmp.eq.s32.totalorder %s26, 0
      %p119 = por %p117, %p118
      %s121 = sadd.s32 %s120, 1
      %p124 = scmp.eq.s32.totalorder %s20, 7
      %p125 = scmp.ne.s32.totalorder %s120, %s122
      %p126 = scmp.eq.s32.totalorder %s20, 0
      %p127 = por %p125, %p126
      %p128 = scmp.ne.s32.totalorder %s120, %s122
      %p129 = scmp.eq.s32.totalorder %s25, 7
      %p130 = por %p128, %p129
      %p131 = scmp.ne.s32.totalorder %s122, %s123
      %p132 = scmp.eq.s32.totalorder %s25, 0
      %p133 = por %p131, %p132
      %p134 = scmp.ne.s32.totalorder %s122, %s123
      %p135 = scmp.eq.s32.totalorder %s26, 7
      %p136 = por %p134, %p135
      %p138 = scmp.ne.s32.totalorder %s123, %s137
      %p139 = scmp.eq.s32.totalorder %s26, 0
      %p140 = por %p138, %p139
      %s142 = sadd.s32 %s141, 1
      %p145 = scmp.eq.s32.totalorder %s20, 7
      %p146 = scmp.ne.s32.totalorder %s141, %s143
      %p147 = scmp.eq.s32.totalorder %s20, 0
      %p148 = por %p146, %p147
      %p149 = scmp.ne.s32.totalorder %s141, %s143
      %p150 = scmp.eq.s32.totalorder %s25, 7
      %p151 = por %p149, %p150
      %p152 = scmp.ne.s32.totalorder %s143, %s144
      %p153 = scmp.eq.s32.totalorder %s25, 0
      %p154 = por %p152, %p153
      %p155 = scmp.ne.s32.totalorder %s143, %s144
      %p156 = scmp.eq.s32.totalorder %s26, 7
      %p157 = por %p155, %p156
      %p159 = scmp.ne.s32.totalorder %s144, %s158
      %p160 = scmp.eq.s32.totalorder %s26, 0
      %p161 = por %p159, %p160
      %s162 = ssub.s32 %s27, %s39
      %s163 = ssub.s32 %s28, %s35
      %s164 = sor.u32 %s162, %s163
      %p165 = scmp.eq.s32.totalorder %s164, 0
      %s167 = sadd.s32 %s166, 1
      %s168 = scalar_select %p165, %s166, %s167
      %p171 = pneg %p165
      %p172 = scmp.eq.s32.totalorder %s20, 7
      %p173 = por %p171, %p172
      %p174 = scmp.ne.s32.totalorder %s166, %s169
      %p175 = scmp.eq.s32.totalorder %s20, 0
      %p176 = por %p174, %p175
      %p177 = scmp.ne.s32.totalorder %s166, %s169
      %p178 = scmp.eq.s32.totalorder %s25, 7
      %p179 = por %p177, %p178
      %p180 = scmp.ne.s32.totalorder %s169, %s170
      %p181 = scmp.eq.s32.totalorder %s25, 0
      %p182 = por %p180, %p181
      %p183 = scmp.ne.s32.totalorder %s169, %s170
      %p184 = scmp.eq.s32.totalorder %s26, 7
      %p185 = por %p183, %p184
      %p187 = scmp.ne.s32.totalorder %s170, %s186
      %p188 = scmp.eq.s32.totalorder %s26, 0
      %p189 = por %p187, %p188
      %p190 = scmp.le.s32.totalorder 1, %s20
      %p191 = scmp.lt.s32.totalorder %s20, 9
      %p192 = pnand %p190, %p191
      %p193 = pneg %p192
      // Predicated region
      $region9: #{tpu_custom_call.1} parent=5 // pred_check
        _
      $region10: #{tpu_custom_call.1} parent=5 // pred_check_branch
        %195 = sbr.rel (%p192) target = $region12
      $region11: #{tpu_custom_call.1} parent=5 // pred_region
        %s196 = ssub.s32 %s20, 1
        // Predicated region
        $region13: #{tpu_custom_call.1} parent=11 // pred_check
          %p197 = pneg %p58
        $region14: #{tpu_custom_call.1} parent=11 // pred_check_branch
          %199 = sbr.rel (%p197) target = $region16
        $region15: #{tpu_custom_call.1} parent=11 // pred_region
          %s200 = smul.u32 2, %s30
          %p201 = scmp.lt.s32.totalorder %s200, 1
          %s202 = scalar_select %p201, %s200, 1
          %s203 = smul.addr %s202, 4
          %s204 = scalar_lea.vmem %s0, %s203
          %s205 = smul.u32 2, %s30
        $region16: #{tpu_custom_call.1} parent=11 // pred_fallthru
          _
        // Predicated region
        $region17: #{tpu_custom_call.1} parent=11 // pred_check
          %p206 = pneg %p133
        $region18: #{tpu_custom_call.1} parent=11 // pred_check_branch
          %208 = sbr.rel (%p206) target = $region20
        $region19: #{tpu_custom_call.1} parent=11 // pred_region
          _
        $region20: #{tpu_custom_call.1} parent=11 // pred_fallthru
          _
        // Predicated region
        $region21: #{tpu_custom_call.1} parent=11 // pred_check
          %p209 = pneg %p154
        $region22: #{tpu_custom_call.1} parent=11 // pred_check_branch
          %211 = sbr.rel (%p209) target = $region24
        $region23: #{tpu_custom_call.1} parent=11 // pred_region
          _
        $region24: #{tpu_custom_call.1} parent=11 // pred_fallthru
          _
      $region12: #{tpu_custom_call.1} parent=5 // pred_fallthru
        _
      %p212 = scmp.lt.s32.totalorder %s20, 8
      // Predicated region
      $region25: #{tpu_custom_call.1} parent=5 // pred_check
        %p213 = pneg %p212
      $region26: #{tpu_custom_call.1} parent=5 // pred_check_branch
        %215 = sbr.rel (%p213) target = $region28
      $region27: #{tpu_custom_call.1} parent=5 // pred_region
        // Predicated region
        $region29: #{tpu_custom_call.1} parent=27 // pred_check
          %p216 = pneg %p78
        $region30: #{tpu_custom_call.1} parent=27 // pred_check_branch
          %218 = sbr.rel (%p216) target = $region32
        $region31: #{tpu_custom_call.1} parent=27 // pred_region
          %s219 = sand.u32 %s68, 1
          %s220 = scalar_lea.sflag [#allocation3], %s219
          %s221 = sand.u32 %s68, 1
          %s222 = smul.addr %s221, 8
          %s223 = scalar_lea.vmem [#allocation2], %s222
          %s225 = ssub.s32 128, 128
          %226 = vsyncadd %s220, %s225
          %s227 = smul.addr %s27, 2
          %s228 = smul.addr %s227, 64
          %s229 = scalar_lea.hbm %s1, %s228
          %s230 = sshll.u32 %s223, 4
          %s231 = int_to_ptr.vmem [resolvable:$true] %s230
          %236 = dma.hbm_to_vmem [thread:$0]  %s229, 128, %s231, %s220, 64, 64, 4
        $region32: #{tpu_custom_call.1} parent=27 // pred_fallthru
          _
        // Predicated region
        $region33: #{tpu_custom_call.1} parent=27 // pred_check
          %p237 = pneg %p106
        $region34: #{tpu_custom_call.1} parent=27 // pred_check_branch
          %239 = sbr.rel (%p237) target = $region36
        $region35: #{tpu_custom_call.1} parent=27 // pred_region
          %s240 = sand.u32 %s96, 1
          %s241 = scalar_lea.sflag [#allocation6], %s240
          %s242 = sand.u32 %s96, 1
          %s243 = smul.addr %s242, 8
          %s244 = scalar_lea.vmem [#allocation5], %s243
          %s245 = smul.u32 2, %s28
          %s247 = ssub.s32 128, 128
          %248 = vsyncadd %s241, %s247
          %s249 = smul.addr %s27, 2
          %s250 = sadd.s32 %s245, %s249
          %s251 = smul.addr %s250, 64
          %s252 = scalar_lea.hbm %s2, %s251
          %s253 = sshll.u32 %s244, 4
          %s254 = int_to_ptr.vmem [resolvable:$true] %s253
          %259 = dma.hbm_to_vmem [thread:$0]  %s252, 128, %s254, %s241, 64, 64, 4
        $region36: #{tpu_custom_call.1} parent=27 // pred_fallthru
          _
      $region28: #{tpu_custom_call.1} parent=5 // pred_fallthru
        _
      %p260 = scmp.le.s32.totalorder 1, %s20
      %p261 = scmp.lt.s32.totalorder %s20, 9
      %p262 = pnand %p260, %p261
      %p263 = pneg %p262
      // Predicated region
      $region37: #{tpu_custom_call.1} parent=5 // pred_check
        _
      $region38: #{tpu_custom_call.1} parent=5 // pred_check_branch
        %265 = sbr.rel (%p262) target = $region40
      $region39: #{tpu_custom_call.1} parent=5 // pred_region
        %s266 = ssub.s32 %s20, 1
        %s267 = sand.u32 %s71, 1
        %s268 = scalar_lea.sflag [#allocation3], %s267
        %s269 = sand.u32 %s71, 1
        %s270 = smul.addr %s269, 8
        %s271 = scalar_lea.vmem [#allocation2], %s270
        // Predicated region
        $region41: #{tpu_custom_call.1} parent=39 // pred_check
          %p272 = pneg %p84
        $region42: #{tpu_custom_call.1} parent=39 // pred_check_branch
          %274 = sbr.rel (%p272) target = $region44
        $region43: #{tpu_custom_call.1} parent=39 // pred_region
          %275 = dma.done %s268, 128
        $region44: #{tpu_custom_call.1} parent=39 // pred_fallthru
          _
        %s276 = sand.u32 %s99, 1
        %s277 = scalar_lea.sflag [#allocation6], %s276
        %s278 = sand.u32 %s99, 1
        %s279 = smul.addr %s278, 8
        %s280 = scalar_lea.vmem [#allocation5], %s279
        // Predicated region
        $region45: #{tpu_custom_call.1} parent=39 // pred_check
          %p281 = pneg %p112
        $region46: #{tpu_custom_call.1} parent=39 // pred_check_branch
          %283 = sbr.rel (%p281) target = $region48
        $region47: #{tpu_custom_call.1} parent=39 // pred_region
          %284 = dma.done %s277, 128
        $region48: #{tpu_custom_call.1} parent=39 // pred_fallthru
          _
        %s285 = smul.u32 2, %s30
        %p286 = scmp.lt.s32.totalorder %s285, 1
        %s287 = scalar_select %p286, %s285, 1
        %s288 = smul.addr %s287, 4
        %s289 = scalar_lea.vmem %s0, %s288
        %p290 = pneg %p58
        %p291 = pneg %p55
        %s292 = sand.u32 %s71, 1
        %s293 = scalar_lea.sflag [#allocation3], %s292
        %s294 = sand.u32 %s71, 1
        %s295 = smul.addr %s294, 8
        %s296 = scalar_lea.vmem [#allocation2], %s295
        %p297 = pneg %p84
        %p298 = pneg %p81
        %s299 = sand.u32 %s99, 1
        %s300 = scalar_lea.sflag [#allocation6], %s299
        %s301 = sand.u32 %s99, 1
        %s302 = smul.addr %s301, 8
        %s303 = scalar_lea.vmem [#allocation5], %s302
        %p304 = pneg %p112
        %p305 = pneg %p109
        %p306 = pneg %p133
        %p307 = pneg %p130
        %p308 = pneg %p154
        %p309 = pneg %p151
        %p310 = pneg %p182
        %p311 = pneg %p179
        %s312 = sand.u32 %s169, 1
        %s313 = scalar_lea.sflag [#allocation4], %s312
        %s314 = sand.u32 %s169, 1
        %s315 = smul.addr %s314, 16
        %s316 = scalar_lea.vmem [#allocation7], %s315
        %s317 = smul.u32 2, %s30
        %p318 = scmp.lt.s32.totalorder %s317, 1
        %s319 = scalar_select %p318, %s317, 1
        %s320 = smul.addr %s319, 4
        %s321 = scalar_lea.vmem %s0, %s320
        %s322 = smul.u32 2, %s30
        %s323 = smul.u32 2, %s30
        %s324 = smul.u32 2, %s30
        %v326 = vld [vmem:[%s321] sm:$0xf]
        %v327 = vld [vmem:[%s321 + $0x4] sm:$0xf]
        %v328 = vld [vmem:[%s271] sm:$0xf]
        %v329 = vld [vmem:[%s271 + $0x4] sm:$0xf]
        %v330 = vld [vmem:[%s280] sm:$0xf]
        %v331 = vld [vmem:[%s280 + $0x4] sm:$0xf]
        %v332 = vld [vmem:[%s3] sm:$0xf]
        %v333 = vld [vmem:[%s3 + $0x4] sm:$0xf]
        %v334 = vld [vmem:[%s3 + $0x8] sm:$0xf]
        %v335 = vld [vmem:[%s3 + $0xc] sm:$0xf]
        %v336 = vld [vmem:[%s3 + $0x10] sm:$0xf]
        %v337 = vld [vmem:[%s3 + $0x14] sm:$0xf]
        %v338 = vld [vmem:[%s3 + $0x18] sm:$0xf]
        %v339 = vld [vmem:[%s3 + $0x1c] sm:$0xf]
        %v340 = vld [vmem:[%s4] sm:$0x1]
        %v341 = vld [vmem:[%s4 + $0x1] sm:$0x1]
        %v342 = vld [vmem:[%s4 + $0x2] sm:$0x1]
        %v343 = vld [vmem:[%s4 + $0x3] sm:$0x1]
        %v344 = vld [vmem:[%s4 + $0x4] sm:$0x1]
        %v347 = vunpack.c.l.b16 %v326
        %v348 = vunpack.c.l.b16 %v327
        %v349 = vpack.c.b16 %v348, %v347
        %v352 = vunpack.c.l.b16 %v328
        %v353 = vunpack.c.l.b16 %v329
        %v354 = vpack.c.b16 %v353, %v352
        %vm356 = vcmask 130048
        %v358 = vsel %vm356, %v349, 0
        %360 = vmatprep.subr.bf16.mxu0 0
        %361 = vmatpush1.bf16.msra.mxu0 0
        %362 = vmatprep.subr.bf16.mxu0 0
        %363 = vmatpush1.bf16.msra.mxu0 0
        %364 = vmatprep.subr.bf16.mxu0 0
        %365 = vmatpush1.bf16.msra.mxu0 0
        %366 = vmatprep.subr.bf16.mxu0 0
        %367 = vmatpush1.bf16.msra.mxu0 0
        %368 = vmatprep.subr.bf16.mxu0 0
        %369 = vmatpush1.bf16.msra.mxu0 0
        %370 = vmatprep.subr.bf16.mxu0 0
        %371 = vmatpush1.bf16.msra.mxu0 0
        %372 = vmatprep.subr.bf16.mxu0 0
        %373 = vmatpush1.bf16.msra.mxu0 0
        %374 = vmatprep.subr.bf16.mxu0 0
        %375 = vmatpush1.bf16.msra.mxu0 %v354
        %376 = vmatprep.subr.bf16.mxu0 0
        %377 = vmatpush2.bf16.msra.mxu0 0
        %378 = vmatprep.subr.bf16.mxu0 0
        %379 = vmatpush2.bf16.msra.mxu0 0
        %380 = vmatprep.subr.bf16.mxu0 0
        %381 = vmatpush2.bf16.msra.mxu0 0
        %382 = vmatprep.subr.bf16.mxu0 0
        %383 = vmatpush2.bf16.msra.mxu0 0
        %384 = vmatprep.subr.bf16.mxu0 0
        %385 = vmatpush2.bf16.msra.mxu0 0
        %386 = vmatprep.subr.bf16.mxu0 0
        %387 = vmatpush2.bf16.msra.mxu0 0
        %388 = vmatprep.subr.bf16.mxu0 0
        %389 = vmatpush2.bf16.msra.mxu0 0
        %390 = vmatprep.subr.bf16.mxu0 0
        %391 = vmatpush2.bf16.msra.mxu0 0
        %392 = vmatprep.mubr.bf16.mxu0 0
        %393 = vmatmul.mubr.bf16.gmra.mxu0 %v358
        %v394 = vpop.f32.mrf.mxu0
        %v395 = vadd.f32 0.0, %v394
        %v396 = vpop.f32.mrf.mxu0
        %v397 = vpop.f32.mrf.mxu0
        %v398 = vadd.f32 0.0, %v397
        %v399 = vpop.f32.mrf.mxu0
        %400 = vdwg.mxu0
        %v401 = vpack.c.bf16 %v398, %v395
        %v402 = vlaneseq
        %v403 = vshrl.u32 %v402, 7
        %v404 = vsub.s32 0, %v403
        %v405 = vrot.slane %v340, %v404
        %v408 = vunpack.c.l.b16 %v332
        %v409 = vunpack.c.l.b16 %v333
        %v410 = vpack.c.b16 %v409, %v408
        %v413 = vsel %vm356, %v401, 0
        %415 = vmatprep.subr.bf16.mxu0 0
        %416 = vmatpush1.bf16.msra.mxu0 0
        %417 = vmatprep.subr.bf16.mxu0 0
        %418 = vmatpush1.bf16.msra.mxu0 0
        %419 = vmatprep.subr.bf16.mxu0 0
        %420 = vmatpush1.bf16.msra.mxu0 0
        %421 = vmatprep.subr.bf16.mxu0 0
        %422 = vmatpush1.bf16.msra.mxu0 0
        %423 = vmatprep.subr.bf16.mxu0 0
        %424 = vmatpush1.bf16.msra.mxu0 0
        %425 = vmatprep.subr.bf16.mxu0 0
        %426 = vmatpush1.bf16.msra.mxu0 0
        %427 = vmatprep.subr.bf16.mxu0 0
        %428 = vmatpush1.bf16.msra.mxu0 0
        %429 = vmatprep.subr.bf16.mxu0 0
        %430 = vmatpush1.bf16.msra.mxu0 %v410
        %431 = vmatprep.subr.bf16.mxu0 0
        %432 = vmatpush2.bf16.msra.mxu0 0
        %433 = vmatprep.subr.bf16.mxu0 0
        %434 = vmatpush2.bf16.msra.mxu0 0
        %435 = vmatprep.subr.bf16.mxu0 0
        %436 = vmatpush2.bf16.msra.mxu0 0
        %437 = vmatprep.subr.bf16.mxu0 0
        %438 = vmatpush2.bf16.msra.mxu0 0
        %439 = vmatprep.subr.bf16.mxu0 0
        %440 = vmatpush2.bf16.msra.mxu0 0
        %441 = vmatprep.subr.bf16.mxu0 0
        %442 = vmatpush2.bf16.msra.mxu0 0
        %443 = vmatprep.subr.bf16.mxu0 0
        %444 = vmatpush2.bf16.msra.mxu0 0
        %445 = vmatprep.subr.bf16.mxu0 0
        %446 = vmatpush2.bf16.msra.mxu0 0
        %447 = vmatprep.mubr.bf16.mxu0 0
        %448 = vmatmul.mubr.bf16.gmra.mxu0 %v413
        %v449 = vpop.f32.mrf.mxu0
        %v450 = vadd.f32 %v405, %v449
        %v451 = vpop.f32.mrf.mxu0
        %v452 = vpop.f32.mrf.mxu0
        %v453 = vadd.f32 %v405, %v452
        %v454 = vpop.f32.mrf.mxu0
        %455 = vdwg.mxu0
        %v456 = vmax.f32 %v450, 0.0
        %v457 = vmax.f32 %v453, 0.0
        %v458 = vpack.c.bf16 %v457, %v456
        %v461 = vunpack.c.l.b16 %v330
        %v462 = vunpack.c.l.b16 %v331
        %v463 = vpack.c.b16 %v462, %v461
        %v466 = vunpack.c.l.b16 %v338
        %v467 = vunpack.c.l.b16 %v339
        %v468 = vpack.c.b16 %v467, %v466
        %v471 = vsel %vm356, %v463, 0
        %473 = vmatprep.subr.bf16.mxu0 0
        %474 = vmatpush1.bf16.msra.mxu0 0
        %475 = vmatprep.subr.bf16.mxu0 0
        %476 = vmatpush1.bf16.msra.mxu0 0
        %477 = vmatprep.subr.bf16.mxu0 0
        %478 = vmatpush1.bf16.msra.mxu0 0
        %479 = vmatprep.subr.bf16.mxu0 0
        %480 = vmatpush1.bf16.msra.mxu0 0
        %481 = vmatprep.subr.bf16.mxu0 0
        %482 = vmatpush1.bf16.msra.mxu0 0
        %483 = vmatprep.subr.bf16.mxu0 0
        %484 = vmatpush1.bf16.msra.mxu0 0
        %485 = vmatprep.subr.bf16.mxu0 0
        %486 = vmatpush1.bf16.msra.mxu0 0
        %487 = vmatprep.subr.bf16.mxu0 0
        %488 = vmatpush1.bf16.msra.mxu0 %v468
        %489 = vmatprep.subr.bf16.mxu0 0
        %490 = vmatpush2.bf16.msra.mxu0 0
        %491 = vmatprep.subr.bf16.mxu0 0
        %492 = vmatpush2.bf16.msra.mxu0 0
        %493 = vmatprep.subr.bf16.mxu0 0
        %494 = vmatpush2.bf16.msra.mxu0 0
        %495 = vmatprep.subr.bf16.mxu0 0
        %496 = vmatpush2.bf16.msra.mxu0 0
        %497 = vmatprep.subr.bf16.mxu0 0
        %498 = vmatpush2.bf16.msra.mxu0 0
        %499 = vmatprep.subr.bf16.mxu0 0
        %500 = vmatpush2.bf16.msra.mxu0 0
        %501 = vmatprep.subr.bf16.mxu0 0
        %502 = vmatpush2.bf16.msra.mxu0 0
        %503 = vmatprep.subr.bf16.mxu0 0
        %504 = vmatpush2.bf16.msra.mxu0 0
        %505 = vmatprep.mubr.bf16.mxu0 0
        %506 = vmatmul.mubr.bf16.gmra.mxu0 %v471
        %v507 = vpop.f32.mrf.mxu0
        %v508 = vadd.f32 0.0, %v507
        %v509 = vpop.f32.mrf.mxu0
        %v510 = vpop.f32.mrf.mxu0
        %v511 = vadd.f32 0.0, %v510
        %v512 = vpop.f32.mrf.mxu0
        %513 = vdwg.mxu0
        %v518 = vunpack.c.l.b16 %v334
        %v519 = vunpack.c.l.b16 %v335
        %v520 = vunpack.c.l.b16 %v336
        %v521 = vunpack.c.l.b16 %v337
        %v522 = vpack.c.b16 %v519, %v518
        %v523 = vpack.c.b16 %v521, %v520
        %vm526 = vcmask 261120
        %v528 = vsel %vm526, %v458, 0
        %530 = vmatprep.subr.bf16.mxu0 0
        %531 = vmatpush1.bf16.msra.mxu0 0
        %532 = vmatprep.subr.bf16.mxu0 0
        %533 = vmatpush1.bf16.msra.mxu0 0
        %534 = vmatprep.subr.bf16.mxu0 0
        %535 = vmatpush1.bf16.msra.mxu0 0
        %536 = vmatprep.subr.bf16.mxu0 0
        %537 = vmatpush1.bf16.msra.mxu0 0
        %538 = vmatprep.subr.bf16.mxu0 0
        %539 = vmatpush1.bf16.msra.mxu0 0
        %540 = vmatprep.subr.bf16.mxu0 0
        %541 = vmatpush1.bf16.msra.mxu0 0
        %542 = vmatprep.subr.bf16.mxu0 0
        %543 = vmatpush1.bf16.msra.mxu0 %v523
        %544 = vmatprep.subr.bf16.mxu0 0
        %545 = vmatpush1.bf16.msra.mxu0 %v522
        %546 = vmatprep.subr.bf16.mxu0 0
        %547 = vmatpush2.bf16.msra.mxu0 0
        %548 = vmatprep.subr.bf16.mxu0 0
        %549 = vmatpush2.bf16.msra.mxu0 0
        %550 = vmatprep.subr.bf16.mxu0 0
        %551 = vmatpush2.bf16.msra.mxu0 0
        %552 = vmatprep.subr.bf16.mxu0 0
        %553 = vmatpush2.bf16.msra.mxu0 0
        %554 = vmatprep.subr.bf16.mxu0 0
        %555 = vmatpush2.bf16.msra.mxu0 0
        %556 = vmatprep.subr.bf16.mxu0 0
        %557 = vmatpush2.bf16.msra.mxu0 0
        %558 = vmatprep.subr.bf16.mxu0 0
        %559 = vmatpush2.bf16.msra.mxu0 0
        %560 = vmatprep.subr.bf16.mxu0 0
        %561 = vmatpush2.bf16.msra.mxu0 0
        %562 = vmatprep.mubr.bf16.mxu0 0
        %563 = vmatmul.mubr.bf16.gmra.mxu0 %v528
        %v564 = vpop.f32.mrf.mxu0
        %v565 = vadd.f32 %v508, %v564
        %v566 = vpop.f32.mrf.mxu0
        %v567 = vpop.f32.mrf.mxu0
        %v568 = vadd.f32 %v511, %v567
        %v569 = vpop.f32.mrf.mxu0
        %570 = vdwg.mxu0
        %v571 = vlaneseq
        %v572 = vshrl.u32 %v571, 7
        %v573 = vsub.s32 0, %v572
        %v574 = vrot.slane %v341, %v573
        %v575 = vadd.f32 %v565, %v574
        %v576 = vadd.f32 %v568, %v574
        %v577 = vmax.f32 %v575, 0.0
        %v578 = vmax.f32 %v576, 0.0
        %v579 = vlaneseq
        %v580 = vshrl.u32 %v579, 7
        %v581 = vsub.s32 0, %v580
        %v582 = vrot.slane %v342, %v581
        %v583 = vmul.f32 %v577, %v582
        %v584 = vmul.f32 %v578, %v582
        %v585 = vsel %vm526, %v583, 0.0
        %586 = vadd.xlane.f32.xlu0 %v585
        %v587 = vpop.xlane.xlu0 %586
        %v588 = vsel %vm526, %v584, 0.0
        %589 = vadd.xlane.f32.xlu0 %v588
        %v590 = vpop.xlane.xlu0 %589
        %v591 = vunpack.c.l.bf16 %v330
        %v592 = vunpack.c.l.bf16 %v331
        %v593 = vlaneseq
        %v594 = vshrl.u32 %v593, 7
        %v595 = vsub.s32 0, %v594
        %v596 = vrot.slane %v343, %v595
        %v597 = vmul.f32 %v591, %v596
        %v598 = vmul.f32 %v592, %v596
        %v599 = vsel %vm356, %v597, 0.0
        %600 = vadd.xlane.f32.xlu0 %v599
        %v601 = vpop.xlane.xlu0 %600
        %v602 = vsel %vm356, %v598, 0.0
        %603 = vadd.xlane.f32.xlu0 %v602
        %v604 = vpop.xlane.xlu0 %603
        %v605 = vadd.f32 %v587, %v601
        %v606 = vadd.f32 %v590, %v604
        %v607 = vlaneseq
        %v608 = vshrl.u32 %v607, 7
        %v609 = vsub.s32 0, %v608
        %v610 = vrot.slane %v344, %v609
        %v611 = vadd.f32 %v605, %v610
        %v612 = vadd.f32 %v606, %v610
        %v613 = vmax.f32 %v611, 0.0
        %v614 = vmax.f32 %v612, 0.0
        %616 = vset.pattern.permute.xlu0 0
        %617 = vperm.xlu0 %616, %v613
        %v618 = vpop.permute.xlu0 %617
        %621 = vset.pattern.permute.xlu0 0
        %622 = vperm.xlu0 %621, %v614
        %v623 = vpop.permute.xlu0 %622
        %625 = vst [vmem:[%s316] sm:$0xff] %v618
        %626 = vst [vmem:[%s316 + $0x8] sm:$0xff] %v623
        %s627 = sand.u32 %s169, 1
        %s628 = scalar_lea.sflag [#allocation4], %s627
        %s629 = sand.u32 %s169, 1
        %s630 = smul.addr %s629, 16
        %s631 = scalar_lea.vmem [#allocation7], %s630
        // Predicated region
        $region49: #{tpu_custom_call.1} parent=39 // pred_check
          %p632 = pneg %p179
        $region50: #{tpu_custom_call.1} parent=39 // pred_check_branch
          %634 = sbr.rel (%p632) target = $region52
        $region51: #{tpu_custom_call.1} parent=39 // pred_region
          %s635 = smul.u32 2, %s30
          %s637 = ssub.s32 256, 256
          %638 = vsyncadd %s628, %s637
          %s639 = smul.addr %s29, 2
          %s640 = sadd.s32 %s635, %s639
          %s641 = smul.addr %s640, 128
          %s642 = scalar_lea.hbm %s5, %s641
          %s643 = sshll.u32 %s631, 4
          %s644 = int_to_ptr.vmem [resolvable:$true] %s643
          %649 = dma.vmem_to_hbm [thread:$0]  %s644, 256, %s642, %s628, 128, 128, 8
        $region52: #{tpu_custom_call.1} parent=39 // pred_fallthru
          _
      $region40: #{tpu_custom_call.1} parent=5 // pred_fallthru
        _
      %p650 = scmp.le.s32.totalorder 2, %s20
      // Predicated region
      $region53: #{tpu_custom_call.1} parent=5 // pred_check
        %p651 = pneg %p650
      $region54: #{tpu_custom_call.1} parent=5 // pred_check_branch
        %653 = sbr.rel (%p651) target = $region56
      $region55: #{tpu_custom_call.1} parent=5 // pred_region
        %s654 = ssub.s32 %s20, 2
        // Predicated region
        $region57: #{tpu_custom_call.1} parent=55 // pred_check
          %p655 = pneg %p185
        $region58: #{tpu_custom_call.1} parent=55 // pred_check_branch
          %657 = sbr.rel (%p655) target = $region60
        $region59: #{tpu_custom_call.1} parent=55 // pred_region
          %s658 = sand.u32 %s170, 1
          %s659 = scalar_lea.sflag [#allocation4], %s658
          %s660 = sand.u32 %s170, 1
          %s661 = smul.addr %s660, 16
          %s662 = scalar_lea.vmem [#allocation7], %s661
          %663 = dma.done %s659, 256
        $region60: #{tpu_custom_call.1} parent=55 // pred_fallthru
          _
      $region56: #{tpu_custom_call.1} parent=5 // pred_fallthru
        _
    $region6: #{tpu_custom_call.1} parent=1 // loop_footer
      %s24 = sadd.s32 1, %s20
    $region7: #{tpu_custom_call.1} parent=1 // loop_footer_branch
      %19 = sbr.rel target = $region3
    $region8: #{tpu_custom_call.1} parent=1 // loop_exit
      _
    %664 = vsyncpa [#allocation3], 1
    %s665 = scalar_lea.sflag [#allocation3], 1
    %666 = vsyncpa %s665, 1
    %667 = vsyncpa [#allocation6], 1
    %s668 = scalar_lea.sflag [#allocation6], 1
    %669 = vsyncpa %s668, 1
    %670 = vsyncpa [#allocation4], 1
    %s671 = scalar_lea.sflag [#allocation4], 1
    %672 = vsyncpa %s671, 1

</llo_original>
